<compile_context>
chip_gen: v6e
topology: v6e:2x2x1
jax: 0.10.0
libtpu: 0.0.40
codegen_flags: <defaults>
</compile_context>

<pallas_src>
import jax
import jax.numpy as jnp
from jax.experimental import pallas as pl
from jax.experimental.pallas import tpu as pltpu


def _pick_tile(total, desired, align):
    """Largest tile <= desired that divides `total`, preferring multiples of
    `align`, falling back to multiples of 8, else the full extent."""
    if total <= desired:
        return total
    for unit in (align, 8):
        t = (desired // unit) * unit
        while t >= unit:
            if total % t == 0:
                return t
            t -= unit
    return total


def _ffn_kernel(x_ref, w13_ref, w2_ref, o_ref, acc_ref):
    # x_ref:   (tm, D)        input rows (resident across the H axis)
    # w13_ref: (D, 2*th)      fused [w1_tile | w3_tile] (streamed over H)
    # w2_ref:  (th, D)        w2 tile (streamed over H)
    # o_ref:   (tm, D)        output tile
    # acc_ref: (tm, D) f32    accumulator scratch
    j = pl.program_id(1)
    th = w13_ref.shape[1] // 2

    @pl.when(j == 0)
    def _():
        acc_ref[...] = jnp.zeros_like(acc_ref)

    x = x_ref[...]
    # One fused MXU pass -> [h1 | h3] with f32 accumulation.
    h = jnp.dot(x, w13_ref[...], preferred_element_type=jnp.float32)
    h1 = h[:, :th]
    h3 = h[:, th:]
    # SiLU gate in f32 (exp/sigmoid go to the EUP).
    gated = (h1 * jax.nn.sigmoid(h1)) * h3

    acc_ref[...] += jnp.dot(gated.astype(w2_ref.dtype), w2_ref[...],
                            preferred_element_type=jnp.float32)

    @pl.when(j == pl.num_programs(1) - 1)
    def _():
        o_ref[...] = acc_ref[...].astype(o_ref.dtype)


def prepare_weights(w1, w2, w3, *, th=512, compute_dtype=jnp.bfloat16):
    """One-time weight prep (do at parameter-load time, off the hot path).

    w1, w3: [H, D]; w2: [D, H]  (PyTorch nn.Linear [out, in] layout).
    Returns dict with:
      w13: [D, 2*H]  column blocks of width 2*th laid out as [w1_tile|w3_tile]
      w2t: [H, D]
      th:  H tile actually used (divides H)
    """
    H, D = w1.shape
    th = _pick_tile(H, th, 128)
    hn = H // th
    w1_t = jnp.asarray(w1, compute_dtype).T.reshape(D, hn, th)
    w3_t = jnp.asarray(w3, compute_dtype).T.reshape(D, hn, th)
    w13 = jnp.concatenate([w1_t, w3_t], axis=-1).reshape(D, 2 * H)
    w2t = jnp.asarray(w2, compute_dtype).T  # (H, D)
    return {"w13": w13, "w2t": w2t, "th": th}


def feed_forward(x, params, *, tm=256, vmem_limit_bytes=64 * 1024 * 1024):
    """x: [B, S, D]; params from prepare_weights(). Returns [B, S, D]."""
    B, S, D = x.shape
    w13, w2t, th = params["w13"], params["w2t"], params["th"]
    H = w2t.shape[0]
    assert w13.shape == (D, 2 * H)
    M = B * S

    tm = _pick_tile(M, tm, 128)
    grid = (M // tm, H // th)   # H innermost -> x tile resident across reduction

    x2d = x.reshape(M, D).astype(w13.dtype)

    out2d = pl.pallas_call(
        _ffn_kernel,
        out_shape=jax.ShapeDtypeStruct((M, D), x.dtype),
        grid_spec=pltpu.PrefetchScalarGridSpec(
            num_scalar_prefetch=0,
            grid=grid,
            in_specs=[
                pl.BlockSpec((tm, D), lambda i, j: (i, 0)),      # x rows (resident over j)
                pl.BlockSpec((D, 2 * th), lambda i, j: (0, j)),  # fused [w1|w3] tile
                pl.BlockSpec((th, D), lambda i, j: (j, 0)),      # w2 tile
            ],
            out_specs=pl.BlockSpec((tm, D), lambda i, j: (i, 0)),
            scratch_shapes=[pltpu.VMEM((tm, D), jnp.float32)],
        ),
        compiler_params=pltpu.CompilerParams(
            dimension_semantics=("parallel", "arbitrary"),
            vmem_limit_bytes=vmem_limit_bytes,
        ),
    )(x2d, w13, w2t)

    # TODO(synk): nn.Dropout treated as identity (eval mode / p=0); no RNG mask applied.
    return out2d.reshape(B, S, D)


def _reference(x, w1, w2, w3):
    h1 = jnp.einsum("bsd,hd->bsh", x, w1)
    h3 = jnp.einsum("bsd,hd->bsh", x, w3)
    g = (h1 * jax.nn.sigmoid(h1)) * h3
    return jnp.einsum("bsh,dh->bsd", g, w2)


if __name__ == "__main__":
    # Module config mirroring FeedForward(dim, hidden_dim=None, multiple_of, dropout)
    dim = 32
    multiple_of = 32
    hidden_dim = 4 * dim
    hidden_dim = int(2 * hidden_dim / 3)
    hidden_dim = multiple_of * ((hidden_dim + multiple_of - 1) // multiple_of)  # -> 96
    dropout = 0.0

    B, S = 2, 8

    key = jax.random.PRNGKey(0)
    kx, k1, k2, k3 = jax.random.split(key, 4)
    x = jax.random.normal(kx, (B, S, dim), dtype=jnp.float32)
    # PyTorch nn.Linear weight shape is [out_features, in_features]
    w1 = jax.random.normal(k1, (hidden_dim, dim), dtype=jnp.float32) * 0.05
    w2 = jax.random.normal(k2, (dim, hidden_dim), dtype=jnp.float32) * 0.05
    w3 = jax.random.normal(k3, (hidden_dim, dim), dtype=jnp.float32) * 0.05

    ref = _reference(x, w1, w2, w3)

    # f32 MXU path (tighter numerical check).
    params_f32 = prepare_weights(w1, w2, w3, compute_dtype=jnp.float32)
    out_f32 = jax.block_until_ready(feed_forward(x, params_f32))
    assert out_f32.shape == (B, S, dim)
    assert jnp.allclose(out_f32, ref, atol=5e-3, rtol=5e-3)

    # bf16 MXU path (default for performance; looser check vs f32 reference).
    params_bf16 = prepare_weights(w1, w2, w3, compute_dtype=jnp.bfloat16)
    out_bf16 = jax.block_until_ready(feed_forward(x, params_bf16))
    assert out_bf16.shape == (B, S, dim)
    assert jnp.allclose(out_bf16.astype(jnp.float32), ref, atol=5e-2, rtol=5e-2)

    print("KERNEL_OK")
</pallas_src>

<mosaic_0001>
module attributes {stable_mosaic.version = 11 : i64} {
  func.func @_ffn_kernel(%arg0: i32, %arg1: i32, %arg2: memref<16x32xf32, #tpu.memory_space<vmem>>, %arg3: memref<32x192xf32, #tpu.memory_space<vmem>>, %arg4: memref<96x32xf32, #tpu.memory_space<vmem>>, %arg5: memref<16x32xf32, #tpu.memory_space<vmem>>, %arg6: memref<16x32xf32, #tpu.memory_space<vmem>>) attributes {dimension_semantics = [#tpu.dimension_semantics<parallel>, #tpu.dimension_semantics<arbitrary>], iteration_bounds = array<i64: 1, 1>, scalar_prefetch = 0 : i64, scratch_operands = 1 : i64, tpu.core_type = #tpu.core_type<tc>, window_params = [{transform_indices = @transform_0, window_bounds = array<i64: 16, 32>}, {transform_indices = @transform_1, window_bounds = array<i64: 32, 192>}, {transform_indices = @transform_2, window_bounds = array<i64: 96, 32>}, {transform_indices = @transform_3, window_bounds = array<i64: 16, 32>}]} {
    %c0_i32 = arith.constant 0 : i32
    %0 = arith.cmpi eq, %arg1, %c0_i32 : i32
    %1 = arith.extui %0 : i1 to i32
    %c0_i32_0 = arith.constant 0 : i32
    %2 = arith.cmpi ne, %1, %c0_i32_0 : i32
    scf.if %2 {
      %cst_14 = arith.constant 0.000000e+00 : f32
      %23 = vector.broadcast %cst_14 : f32 to vector<16x32xf32>
      %c0_15 = arith.constant 0 : index
      %c0_16 = arith.constant 0 : index
      %24 = vector.load %arg6[%c0_15, %c0_16] : memref<16x32xf32, #tpu.memory_space<vmem>>, vector<16x32xf32>
      tpu.vector_store %arg6[%c0_15, %c0_16], %23 {strides = array<i32>} : memref<16x32xf32, #tpu.memory_space<vmem>>, vector<16x32xf32>,
    } else {
    }
    %c0 = arith.constant 0 : index
    %c0_1 = arith.constant 0 : index
    %3 = vector.load %arg2[%c0, %c0_1] : memref<16x32xf32, #tpu.memory_space<vmem>>, vector<16x32xf32>
    %c0_2 = arith.constant 0 : index
    %c0_3 = arith.constant 0 : index
    %4 = vector.load %arg3[%c0_2, %c0_3] : memref<32x192xf32, #tpu.memory_space<vmem>>, vector<32x192xf32>
    %cst = arith.constant dense<0.000000e+00> : vector<16x192xf32>
    %5 = tpu.matmul %3, %4, %cst {dimension_numbers = #tpu.dot_dimension_numbers<[1], [0], [0], [1], [0, 0, 1, 1], [], []>} : vector<16x32xf32>, vector<32x192xf32>, vector<16x192xf32> -> vector<16x192xf32>
    %6 = vector.extract_strided_slice %5 {offsets = [0, 0], sizes = [16, 96], strides = [1, 1]} : vector<16x192xf32> to vector<16x96xf32>
    %7 = vector.extract_strided_slice %5 {offsets = [0, 96], sizes = [16, 96], strides = [1, 1]} : vector<16x192xf32> to vector<16x96xf32>
    %8 = arith.negf %6 : vector<16x96xf32>
    %9 = math.exp %8 : vector<16x96xf32>
    %cst_4 = arith.constant 1.000000e+00 : f32
    %10 = vector.broadcast %cst_4 : f32 to vector<16x96xf32>
    %11 = arith.addf %10, %9 : vector<16x96xf32>
    %12 = arith.divf %10, %11 : vector<16x96xf32>
    %13 = arith.mulf %6, %12 : vector<16x96xf32>
    %14 = arith.mulf %13, %7 : vector<16x96xf32>
    %c0_5 = arith.constant 0 : index
    %c0_6 = arith.constant 0 : index
    %15 = vector.load %arg6[%c0_5, %c0_6] : memref<16x32xf32, #tpu.memory_space<vmem>>, vector<16x32xf32>
    %c0_7 = arith.constant 0 : index
    %c0_8 = arith.constant 0 : index
    %16 = vector.load %arg4[%c0_7, %c0_8] : memref<96x32xf32, #tpu.memory_space<vmem>>, vector<96x32xf32>
    %cst_9 = arith.constant dense<0.000000e+00> : vector<16x32xf32>
    %17 = tpu.matmul %14, %16, %cst_9 {dimension_numbers = #tpu.dot_dimension_numbers<[1], [0], [0], [1], [0, 0, 1, 1], [], []>} : vector<16x96xf32>, vector<96x32xf32>, vector<16x32xf32> -> vector<16x32xf32>
    %18 = arith.addf %15, %17 : vector<16x32xf32>
    %c0_10 = arith.constant 0 : index
    %c0_11 = arith.constant 0 : index
    %19 = vector.load %arg6[%c0_10, %c0_11] : memref<16x32xf32, #tpu.memory_space<vmem>>, vector<16x32xf32>
    tpu.vector_store %arg6[%c0_10, %c0_11], %18 {strides = array<i32>} : memref<16x32xf32, #tpu.memory_space<vmem>>, vector<16x32xf32>,
    %c0_i32_12 = arith.constant 0 : i32
    %20 = arith.cmpi eq, %arg1, %c0_i32_12 : i32
    %21 = arith.extui %20 : i1 to i32
    %c0_i32_13 = arith.constant 0 : i32
    %22 = arith.cmpi ne, %21, %c0_i32_13 : i32
    scf.if %22 {
      %c0_14 = arith.constant 0 : index
      %c0_15 = arith.constant 0 : index
      %23 = vector.load %arg6[%c0_14, %c0_15] : memref<16x32xf32, #tpu.memory_space<vmem>>, vector<16x32xf32>
      %c0_16 = arith.constant 0 : index
      %c0_17 = arith.constant 0 : index
      %24 = vector.load %arg5[%c0_16, %c0_17] : memref<16x32xf32, #tpu.memory_space<vmem>>, vector<16x32xf32>
      tpu.vector_store %arg5[%c0_16, %c0_17], %23 {strides = array<i32>} : memref<16x32xf32, #tpu.memory_space<vmem>>, vector<16x32xf32>,
    } else {
    }
    return
  }
  func.func @transform_0(%arg0: i32, %arg1: i32) -> (i32, i32) {
    %c0_i32 = arith.constant 0 : i32
    %c0_i32_0 = arith.constant 0 : i32
    return %arg0, %c0_i32 : i32, i32
  }
  func.func @transform_1(%arg0: i32, %arg1: i32) -> (i32, i32) {
    %c0_i32 = arith.constant 0 : i32
    %c0_i32_0 = arith.constant 0 : i32
    return %c0_i32, %arg1 : i32, i32
  }
  func.func @transform_2(%arg0: i32, %arg1: i32) -> (i32, i32) {
    %c0_i32 = arith.constant 0 : i32
    %c0_i32_0 = arith.constant 0 : i32
    return %arg1, %c0_i32 : i32, i32
  }
  func.func @transform_3(%arg0: i32, %arg1: i32) -> (i32, i32) {
    %c0_i32 = arith.constant 0 : i32
    %c0_i32_0 = arith.constant 0 : i32
    return %arg0, %c0_i32 : i32, i32
  }
}

</mosaic_0001>

<llo_original>
// kernel: tpu_custom_call.1
$region0: #{tpu_custom_call.1}
  #allocation0 [shape = 'u32[]', space=smem, size = 0x4, offset = 0x4, fixed_abs, tag = 'smem constant byte address 0x4 - core index']
  #allocation1 [shape = 'u32[144,128]{1,0:T(1,128)}', space=vmem, size = 0x12000, scoped, tag = 'internal scratch']
  #allocation2 [shape = 'f32[16,32]{1,0:T(8,128)}', space=vmem, size = 0x2000, scoped, tag = 'scratch operand']
  %s0 = inlined_call_operand.vmem [shape: f32[16,32], index: 0, kind: input, shape index: {}]
  %s1 = inlined_call_operand.vmem [shape: f32[32,192], index: 1, kind: input, shape index: {}]
  %s2 = inlined_call_operand.vmem [shape: f32[96,32], index: 2, kind: input, shape index: {}]
  %s3 = inlined_call_operand.hbm [shape: f32[16,32], index: 3, kind: output, shape index: {}]
  %s4 = sld [smem:[#allocation0]]
  $region30: #{tpu_custom_call.1} parent=0
    _
  %s6 = ssub.s32 1, %s4
  %s7 = scalar_select 0, %s6, %s4
  $region1: #{tpu_custom_call.1} parent=0
    #allocation3 [shape = 'u8[8192]{0}', space=vmem, size = 0x2000, scoped, tag = 'output window, operand 0, single buffered']
    #allocation4 [shape = 's32[1]{0}', space=sflag, size = 0x4, scoped, tag = 'scoped memory for tpu_custom_call.1']
    %8 = vsyncpa [#allocation4], 0
    // Predicated region
    $region2: #{tpu_custom_call.1} parent=1 // pred_check
      _
    $region3: #{tpu_custom_call.1} parent=1 // pred_check_branch
      %10 = sbr.rel (0) target = $region5
    $region4: #{tpu_custom_call.1} parent=1 // pred_region
      _
    $region5: #{tpu_custom_call.1} parent=1 // pred_fallthru
      _
    // Predicated region
    $region6: #{tpu_custom_call.1} parent=1 // pred_check
      _
    $region7: #{tpu_custom_call.1} parent=1 // pred_check_branch
      %12 = sbr.rel (0) target = $region9
    $region8: #{tpu_custom_call.1} parent=1 // pred_region
      _
    $region9: #{tpu_custom_call.1} parent=1 // pred_fallthru
      _
    // Predicated region
    $region10: #{tpu_custom_call.1} parent=1 // pred_check
      _
    $region11: #{tpu_custom_call.1} parent=1 // pred_check_branch
      %14 = sbr.rel (0) target = $region13
    $region12: #{tpu_custom_call.1} parent=1 // pred_region
      _
    $region13: #{tpu_custom_call.1} parent=1 // pred_fallthru
      _
    %p15 = scmp.eq.s32.totalorder 0, 0
    // Predicated region
    $region14: #{tpu_custom_call.1} parent=1 // pred_check
      %p16 = pneg %p15
    $region15: #{tpu_custom_call.1} parent=1 // pred_check_branch
      %18 = sbr.rel (%p16) target = $region17
    $region16: #{tpu_custom_call.1} parent=1 // pred_region
      %vm19 = vcmask 261120
      %20 = vst.msk [vmem:[#allocation2] sm:$0xff] %vm19, 0.0
      %21 = vst.msk [vmem:[#allocation2 + $0x8] sm:$0xff] %vm19, 0.0
    $region17: #{tpu_custom_call.1} parent=1 // pred_fallthru
      _
    %v22 = vld [vmem:[%s0] sm:$0xff]
    %v23 = vld [vmem:[%s0 + $0x8] sm:$0xff]
    %v24 = vld [vmem:[%s1] sm:$0xff]
    %v25 = vld [vmem:[%s1 + $0x8] sm:$0xff]
    %v26 = vld [vmem:[%s1 + $0x10] sm:$0xff]
    %v27 = vld [vmem:[%s1 + $0x18] sm:$0xff]
    %v28 = vld [vmem:[%s1 + $0x20] sm:$0xff]
    %v29 = vld [vmem:[%s1 + $0x28] sm:$0xff]
    %v30 = vld [vmem:[%s1 + $0x30] sm:$0xff]
    %v31 = vld [vmem:[%s1 + $0x38] sm:$0xff]
    %vm32 = vcmask 261120
    %v34 = vsel %vm32, %v22, 0
    %v37 = vsel %vm32, %v23, 0
    %39 = vmatprep.subr.mxu0 0.0
    %40 = vmatpush1.msra.mxu0 0.0
    %41 = vmatprep.subr.mxu0 0.0
    %42 = vmatpush1.msra.mxu0 0.0
    %43 = vmatprep.subr.mxu0 0.0
    %44 = vmatpush1.msra.mxu0 0.0
    %45 = vmatprep.subr.mxu0 0.0
    %46 = vmatpush1.msra.mxu0 0.0
    %47 = vmatprep.subr.mxu0 0.0
    %48 = vmatpush1.msra.mxu0 0.0
    %49 = vmatprep.subr.mxu0 0.0
    %50 = vmatpush1.msra.mxu0 0.0
    %51 = vmatprep.subr.mxu0 0.0
    %52 = vmatpush1.msra.mxu0 0.0
    %53 = vmatprep.subr.mxu0 0.0
    %54 = vmatpush1.msra.mxu0 0.0
    %55 = vmatprep.subr.mxu0 0.0
    %56 = vmatpush1.msra.mxu0 0.0
    %57 = vmatprep.subr.mxu0 0.0
    %58 = vmatpush1.msra.mxu0 0.0
    %59 = vmatprep.subr.mxu0 0.0
    %60 = vmatpush1.msra.mxu0 0.0
    %61 = vmatprep.subr.mxu0 0.0
    %62 = vmatpush1.msra.mxu0 0.0
    %63 = vmatprep.subr.mxu0 %v31
    %64 = vmatpush1.msra.mxu0 %v30
    %65 = vmatprep.subr.mxu0 %v29
    %66 = vmatpush1.msra.mxu0 %v28
    %67 = vmatprep.subr.mxu0 %v27
    %68 = vmatpush1.msra.mxu0 %v26
    %69 = vmatprep.subr.mxu0 %v25
    %70 = vmatpush1.msra.mxu0 %v24
    %71 = vmatprep.subr.mxu0 0.0
    %72 = vmatpush2.msra.mxu0 0.0
    %73 = vmatprep.subr.mxu0 0.0
    %74 = vmatpush2.msra.mxu0 0.0
    %75 = vmatprep.subr.mxu0 0.0
    %76 = vmatpush2.msra.mxu0 0.0
    %77 = vmatprep.subr.mxu0 0.0
    %78 = vmatpush2.msra.mxu0 0.0
    %79 = vmatprep.subr.mxu0 0.0
    %80 = vmatpush2.msra.mxu0 0.0
    %81 = vmatprep.subr.mxu0 0.0
    %82 = vmatpush2.msra.mxu0 0.0
    %83 = vmatprep.subr.mxu0 0.0
    %84 = vmatpush2.msra.mxu0 0.0
    %85 = vmatprep.subr.mxu0 0.0
    %86 = vmatpush2.msra.mxu0 0.0
    %87 = vmatprep.subr.mxu0 0.0
    %88 = vmatpush2.msra.mxu0 0.0
    %89 = vmatprep.subr.mxu0 0.0
    %90 = vmatpush2.msra.mxu0 0.0
    %91 = vmatprep.subr.mxu0 0.0
    %92 = vmatpush2.msra.mxu0 0.0
    %93 = vmatprep.subr.mxu0 0.0
    %94 = vmatpush2.msra.mxu0 0.0
    %95 = vmatprep.subr.mxu0 0.0
    %96 = vmatpush2.msra.mxu0 0.0
    %97 = vmatprep.subr.mxu0 0.0
    %98 = vmatpush2.msra.mxu0 0.0
    %99 = vmatprep.subr.mxu0 0.0
    %100 = vmatpush2.msra.mxu0 0.0
    %101 = vmatprep.subr.mxu0 0.0
    %102 = vmatpush2.msra.mxu0 0.0
    %103 = vmatprep.mubr.f32.mxu0 0.0
    %104 = vmatmul.mubr.f32.gmra.mxu0 %v34
    %v105 = vpop.f32.mrf.mxu0
    %v106 = vadd.f32 0.0, %v105
    %v107 = vpop.f32.mrf.mxu0
    %v108 = vadd.f32 0.0, %v107
    %109 = vmatprep.mubr.f32.mxu0 0.0
    %110 = vmatmul.mubr.f32.gmra.mxu0 %v37
    %v111 = vpop.f32.mrf.mxu0
    %v112 = vadd.f32 0.0, %v111
    %v113 = vpop.f32.mrf.mxu0
    %v114 = vadd.f32 0.0, %v113
    %115 = vdwg.mxu0
    %v116 = vxor.u32 %v106, 2147483648
    %v117 = vxor.u32 %v112, 2147483648
    %v118 = vmul.f32 %v116, 1.442695
    %v119 = vpow.pop %v118
    %v120 = vmul.f32 %v117, 1.442695
    %v121 = vpow.pop %v120
    %v122 = vadd.f32 %v119, 1.0
    %v123 = vadd.f32 %v121, 1.0
    %v124 = vrcp.pop %v122
    %v125 = vmul.f32 1.0, %v124
    %v126 = vrcp.pop %v123
    %v127 = vmul.f32 1.0, %v126
    %v128 = vmul.f32 %v106, %v125
    %v129 = vmul.f32 %v112, %v127
    %134 = vrot.lane.b32.xlu0 %v106, 32
    %v135 = vpop.permute.xlu0 %134
    %136 = vrot.lane.b32.xlu0 %v108, 32
    %v137 = vpop.permute.xlu0 %136
    %138 = vrot.lane.b32.xlu0 %v112, 32
    %v139 = vpop.permute.xlu0 %138
    %140 = vrot.lane.b32.xlu0 %v114, 32
    %v141 = vpop.permute.xlu0 %140
    %v142 = vsel %vm32, %v135, %v137
    %v143 = vsel %vm32, %v139, %v141
    %v146 = vmul.f32 %v128, %v142
    %v147 = vmul.f32 %v129, %v143
    %v148 = vld [vmem:[#allocation2] sm:$0xff]
    %v149 = vld [vmem:[#allocation2 + $0x8] sm:$0xff]
    %v150 = vld [vmem:[%s2] sm:$0xff]
    %v151 = vld [vmem:[%s2 + $0x8] sm:$0xff]
    %v152 = vld [vmem:[%s2 + $0x10] sm:$0xff]
    %v153 = vld [vmem:[%s2 + $0x18] sm:$0xff]
    %v154 = vld [vmem:[%s2 + $0x20] sm:$0xff]
    %v155 = vld [vmem:[%s2 + $0x28] sm:$0xff]
    %v156 = vld [vmem:[%s2 + $0x30] sm:$0xff]
    %v157 = vld [vmem:[%s2 + $0x38] sm:$0xff]
    %v158 = vld [vmem:[%s2 + $0x40] sm:$0xff]
    %v159 = vld [vmem:[%s2 + $0x48] sm:$0xff]
    %v160 = vld [vmem:[%s2 + $0x50] sm:$0xff]
    %v161 = vld [vmem:[%s2 + $0x58] sm:$0xff]
    %vm162 = vcmask 785408
    %v164 = vsel %vm162, %v146, 0
    %v167 = vsel %vm162, %v147, 0
    %169 = vmatprep.subr.mxu0 0.0
    %170 = vmatpush1.msra.mxu0 0.0
    %171 = vmatprep.subr.mxu0 0.0
    %172 = vmatpush1.msra.mxu0 0.0
    %173 = vmatprep.subr.mxu0 0.0
    %174 = vmatpush1.msra.mxu0 0.0
    %175 = vmatprep.subr.mxu0 0.0
    %176 = vmatpush1.msra.mxu0 0.0
    %177 = vmatprep.subr.mxu0 0.0
    %178 = vmatpush1.msra.mxu0 %v161
    %179 = vmatprep.subr.mxu0 0.0
    %180 = vmatpush1.msra.mxu0 %v160
    %181 = vmatprep.subr.mxu0 0.0
    %182 = vmatpush1.msra.mxu0 %v159
    %183 = vmatprep.subr.mxu0 0.0
    %184 = vmatpush1.msra.mxu0 %v158
    %185 = vmatprep.subr.mxu0 0.0
    %186 = vmatpush1.msra.mxu0 %v157
    %187 = vmatprep.subr.mxu0 0.0
    %188 = vmatpush1.msra.mxu0 %v156
    %189 = vmatprep.subr.mxu0 0.0
    %190 = vmatpush1.msra.mxu0 %v155
    %191 = vmatprep.subr.mxu0 0.0
    %192 = vmatpush1.msra.mxu0 %v154
    %193 = vmatprep.subr.mxu0 0.0
    %194 = vmatpush1.msra.mxu0 %v153
    %195 = vmatprep.subr.mxu0 0.0
    %196 = vmatpush1.msra.mxu0 %v152
    %197 = vmatprep.subr.mxu0 0.0
    %198 = vmatpush1.msra.mxu0 %v151
    %199 = vmatprep.subr.mxu0 0.0
    %200 = vmatpush1.msra.mxu0 %v150
    %201 = vmatprep.subr.mxu0 0.0
    %202 = vmatpush2.msra.mxu0 0.0
    %203 = vmatprep.subr.mxu0 0.0
    %204 = vmatpush2.msra.mxu0 0.0
    %205 = vmatprep.subr.mxu0 0.0
    %206 = vmatpush2.msra.mxu0 0.0
    %207 = vmatprep.subr.mxu0 0.0
    %208 = vmatpush2.msra.mxu0 0.0
    %209 = vmatprep.subr.mxu0 0.0
    %210 = vmatpush2.msra.mxu0 0.0
    %211 = vmatprep.subr.mxu0 0.0
    %212 = vmatpush2.msra.mxu0 0.0
    %213 = vmatprep.subr.mxu0 0.0
    %214 = vmatpush2.msra.mxu0 0.0
    %215 = vmatprep.subr.mxu0 0.0
    %216 = vmatpush2.msra.mxu0 0.0
    %217 = vmatprep.subr.mxu0 0.0
    %218 = vmatpush2.msra.mxu0 0.0
    %219 = vmatprep.subr.mxu0 0.0
    %220 = vmatpush2.msra.mxu0 0.0
    %221 = vmatprep.subr.mxu0 0.0
    %222 = vmatpush2.msra.mxu0 0.0
    %223 = vmatprep.subr.mxu0 0.0
    %224 = vmatpush2.msra.mxu0 0.0
    %225 = vmatprep.subr.mxu0 0.0
    %226 = vmatpush2.msra.mxu0 0.0
    %227 = vmatprep.subr.mxu0 0.0
    %228 = vmatpush2.msra.mxu0 0.0
    %229 = vmatprep.subr.mxu0 0.0
    %230 = vmatpush2.msra.mxu0 0.0
    %231 = vmatprep.subr.mxu0 0.0
    %232 = vmatpush2.msra.mxu0 0.0
    %233 = vmatprep.mubr.f32.mxu0 0.0
    %234 = vmatmul.mubr.f32.gmra.mxu0 %v164
    %v235 = vpop.f32.mrf.mxu0
    %v236 = vadd.f32 0.0, %v235
    %v237 = vpop.f32.mrf.mxu0
    %238 = vmatprep.mubr.f32.mxu0 0.0
    %239 = vmatmul.mubr.f32.gmra.mxu0 %v167
    %v240 = vpop.f32.mrf.mxu0
    %v241 = vadd.f32 0.0, %v240
    %v242 = vpop.f32.mrf.mxu0
    %243 = vdwg.mxu0
    %v244 = vadd.f32 %v148, %v236
    %v245 = vadd.f32 %v149, %v241
    %246 = vst.msk [vmem:[#allocation2] sm:$0xff] %vm32, %v244
    %247 = vst.msk [vmem:[#allocation2 + $0x8] sm:$0xff] %vm32, %v245
    // Predicated region
    $region18: #{tpu_custom_call.1} parent=1 // pred_check
      %p248 = pneg %p15
    $region19: #{tpu_custom_call.1} parent=1 // pred_check_branch
      %250 = sbr.rel (%p248) target = $region21
    $region20: #{tpu_custom_call.1} parent=1 // pred_region
      %v251 = vld [vmem:[#allocation2] sm:$0xff]
      %v252 = vld [vmem:[#allocation2 + $0x8] sm:$0xff]
      %253 = vst.msk [vmem:[#allocation3] sm:$0xff] %vm32, %v251
      %254 = vst.msk [vmem:[#allocation3 + $0x8] sm:$0xff] %vm32, %v252
    $region21: #{tpu_custom_call.1} parent=1 // pred_fallthru
      _
    // Predicated region
    $region22: #{tpu_custom_call.1} parent=1 // pred_check
      _
    $region23: #{tpu_custom_call.1} parent=1 // pred_check_branch
      %256 = sbr.rel (0) target = $region25
    $region24: #{tpu_custom_call.1} parent=1 // pred_region
      %s258 = ssub.s32 256, 256
      %259 = vsyncadd [#allocation4], %s258
      %s260 = sshll.u32 [#allocation3], 4
      %s261 = int_to_ptr.vmem [resolvable:$true] %s260
      %266 = dma.vmem_to_hbm [thread:$0]  %s261, 256, %s3, [#allocation4], 128, 128, 8
    $region25: #{tpu_custom_call.1} parent=1 // pred_fallthru
      _
    // Predicated region
    $region26: #{tpu_custom_call.1} parent=1 // pred_check
      _
    $region27: #{tpu_custom_call.1} parent=1 // pred_check_branch
      %268 = sbr.rel (0) target = $region29
    $region28: #{tpu_custom_call.1} parent=1 // pred_region
      %269 = dma.done [#allocation4], 256
    $region29: #{tpu_custom_call.1} parent=1 // pred_fallthru
      _
    %270 = vsyncpa [#allocation4], 1

</llo_original>
